<compile_context>
chip_gen: v6e
topology: v6e:2x2x1
jax: 0.10.0
libtpu: 0.0.40
codegen_flags: <defaults>
</compile_context>

<pallas_src>
import numpy as np
import jax
import jax.numpy as jnp
from jax.experimental import pallas as pl
from jax.experimental.pallas import tpu as pltpu


def _round_up(x: int, m: int) -> int:
    return ((x + m - 1) // m) * m


def fm_kernel(bias_ref, off_ref, idx_ref, tab_ref, out_ref):
    # bias_ref: SMEM (1,)      f32
    # off_ref : SMEM (F,)      i32   per-field vocab offsets
    # idx_ref : VMEM (F, Bt)   i32   raw field indices, batch on lanes
    # tab_ref : VMEM (E+2, V)  f32   [ emb^T ; fc^T ; (sum_e emb^2)^T ]
    # out_ref : VMEM (1, Bt)   f32   sigmoid output, lane-dense
    F, _ = idx_ref.shape
    Ep2, V = tab_ref.shape
    E = Ep2 - 2

    # (V, 1) iota; the compare broadcasts it against each (1, Bt) index row,
    # so no (V, Bt) int32 iota temp is materialized.
    iota_v = jax.lax.broadcasted_iota(jnp.int32, (V, 1), 0)

    # One-hot counts: counts[v, b] = #fields of batch column b hitting vocab row v.
    # Offset add fused here; F masks tree-summed in int32, one final f32 convert.
    masks = []
    for f in range(F):                                     # F is tiny and static
        row = idx_ref[pl.ds(f, 1), :] + off_ref[f]         # (1, Bt) i32
        masks.append((iota_v == row).astype(jnp.int32))    # (V, Bt) 0/1
    while len(masks) > 1:
        nxt = [masks[i] + masks[i + 1] for i in range(0, len(masks) - 1, 2)]
        if len(masks) % 2:
            nxt.append(masks[-1])
        masks = nxt
    counts = masks[0].astype(jnp.float32)                  # (V, Bt)

    # Single MXU contraction produces everything:
    #   rows [0, E)  -> sum_f emb[idx]           (field_sum)
    #   row  E       -> sum_f fc[idx]            (linear, pre-bias)
    #   row  E+1     -> sum_f sum_e emb[idx]^2   (sum_of_sq)
    res = jnp.dot(tab_ref[...], counts, preferred_element_type=jnp.float32)  # (E+2, Bt)
    field_sum = res[:E, :]                                  # (E, Bt)
    linear = res[E:E + 1, :]                                # (1, Bt)
    sum_of_sq = res[E + 1:E + 2, :]                         # (1, Bt)

    sq_of_sum = jnp.sum(field_sum * field_sum, axis=0, keepdims=True)        # (1, Bt)
    out_ref[...] = jax.nn.sigmoid(
        linear + bias_ref[0] + 0.5 * (sq_of_sum - sum_of_sq))


def fm_model_forward(x_idx, offsets, emb_table, fc_table, bias, *, batch_tile=8192):
    """x_idx: (B, F) integer field indices. Returns (B,) f32 probabilities."""
    B, F = x_idx.shape
    V, E = emb_table.shape

    # Parameter-side precompute (tiny: (E+2) x V): augmented transposed table.
    t2 = jnp.sum(emb_table * emb_table, axis=1, keepdims=True)               # (V, 1)
    tab_aug = jnp.concatenate(
        [emb_table.T, fc_table.reshape(V, 1).T, t2.T], axis=0
    ).astype(jnp.float32)                                                    # (E+2, V)

    # Only wrapper-side index work: put batch on the 128-lane axis. Offset add is
    # fused into the kernel; ragged last tiles are handled by Pallas block padding
    # (OOB reads are garbage, OOB output writes are dropped), so no jnp.pad pass.
    idx = x_idx.astype(jnp.int32).T                                          # (F, B)

    # Lane-dense batch tile (multiple of 128). Cap so large B still gives >= 2 grid
    # steps for v7x's two TensorCores; harmless single step for tiny B / v5e / v6e.
    b_tile = min(batch_tile, _round_up(pl.cdiv(B, 2), 128))
    grid = (pl.cdiv(B, b_tile),)

    cost = pl.CostEstimate(
        flops=int(B * (F * V + 2 * (E + 2) * V + 3 * E + 8)),
        transcendentals=int(B),
        bytes_accessed=int(4 * (F * B + B + (E + 2) * V + F + 1)),
    )

    out = pl.pallas_call(
        fm_kernel,
        out_shape=jax.ShapeDtypeStruct((1, B), jnp.float32),
        grid=grid,
        in_specs=[
            pl.BlockSpec(memory_space=pltpu.SMEM),               # bias (1,)
            pl.BlockSpec(memory_space=pltpu.SMEM),               # offsets (F,)
            pl.BlockSpec((F, b_tile), lambda i: (0, i)),         # idx, tiled over batch
            pl.BlockSpec((E + 2, V), lambda i: (0, 0)),          # resident augmented table
        ],
        out_specs=pl.BlockSpec((1, b_tile), lambda i: (0, i)),   # lane-dense output slab
        compiler_params=pltpu.CompilerParams(
            dimension_semantics=("parallel",),
        ),
        cost_estimate=cost,
    )(bias.astype(jnp.float32), offsets.astype(jnp.int32), idx, tab_aug)

    return out[0, :]


def reference_forward(x_idx, offsets, emb_table, fc_table, bias):
    idx = x_idx + offsets[None, :]
    emb = jnp.take(emb_table, idx, axis=0)                 # (B, F, E)
    lin = jnp.take(fc_table, idx, axis=0)[..., 0]          # (B, F)
    linear = jnp.sum(lin, axis=1, keepdims=True) + bias
    s = jnp.sum(emb, axis=1)
    ix = jnp.sum(s * s - jnp.sum(emb * emb, axis=1), axis=1, keepdims=True)
    return jax.nn.sigmoid(linear + 0.5 * ix)[:, 0]


if __name__ == "__main__":
    # Model hyperparameters (small, consistent with FactorizationMachineModel).
    field_dims = [5, 7, 4, 8]        # num_fields = 4, vocab = 24
    embed_dim = 16
    batch = 8
    num_fields = len(field_dims)
    vocab = int(np.sum(field_dims))

    key = jax.random.PRNGKey(0)
    k_emb, k_fc, k_x = jax.random.split(key, 3)

    # FeaturesEmbedding: xavier_uniform_ on (vocab, embed_dim).
    bound = float(np.sqrt(6.0 / (vocab + embed_dim)))
    emb_table = jax.random.uniform(k_emb, (vocab, embed_dim), jnp.float32,
                                   minval=-bound, maxval=bound)
    # FeaturesLinear: nn.Embedding default init N(0, 1), output_dim=1; bias zeros.
    fc_table = jax.random.normal(k_fc, (vocab, 1), jnp.float32)
    bias = jnp.zeros((1,), jnp.float32)

    # Per-field offsets: (0, cumsum(field_dims)[:-1]).
    offsets = jnp.asarray(
        np.concatenate([[0], np.cumsum(field_dims)[:-1]]).astype(np.int32))

    # Input: long tensor (batch, num_fields) with per-field valid indices.
    maxes = jnp.asarray(np.array(field_dims, dtype=np.int32))
    raw = jax.random.randint(k_x, (batch, num_fields), 0, 2**30, dtype=jnp.int32)
    x_idx = raw % maxes[None, :]

    out = jax.jit(fm_model_forward)(x_idx, offsets, emb_table, fc_table, bias)
    out = jax.block_until_ready(out)

    ref = reference_forward(x_idx, offsets, emb_table, fc_table, bias)
    assert out.shape == (batch,)
    np.testing.assert_allclose(np.asarray(out), np.asarray(ref), rtol=1e-5, atol=1e-5)

    print("KERNEL_OK")
</pallas_src>

<mosaic_0001>
module attributes {stable_mosaic.version = 11 : i64} {
  func.func @fm_kernel(%arg0: i32, %arg1: memref<1xf32, #tpu.memory_space<smem>>, %arg2: memref<4xi32, #tpu.memory_space<smem>>, %arg3: memref<4x128xi32, #tpu.memory_space<vmem>>, %arg4: memref<18x24xf32, #tpu.memory_space<vmem>>, %arg5: memref<1x128xf32, #tpu.memory_space<vmem>>) attributes {dimension_semantics = [#tpu.dimension_semantics<parallel>], iteration_bounds = array<i64: 1>, scalar_prefetch = 0 : i64, scratch_operands = 0 : i64, tpu.core_type = #tpu.core_type<tc>, window_params = [{transform_indices = @transform_0, window_bounds = array<i64: 1>}, {transform_indices = @transform_1, window_bounds = array<i64: 4>}, {transform_indices = @transform_2, window_bounds = array<i64: 4, 128>}, {pipeline_mode = #tpu.pipeline_mode<synchronous>, transform_indices = @transform_3, window_bounds = array<i64: 18, 24>}, {transform_indices = @transform_4, window_bounds = array<i64: 1, 128>}]} {
    %0 = tpu.iota {dimensions = array<i32: 0>} : vector<24x1xi32>
    %c0 = arith.constant 0 : index
    %c0_0 = arith.constant 0 : index
    %1 = vector.load %arg3[%c0, %c0_0] : memref<4x128xi32, #tpu.memory_space<vmem>>, vector<1x128xi32>
    %c0_1 = arith.constant 0 : index
    %2 = memref.load %arg2[%c0_1] : memref<4xi32, #tpu.memory_space<smem>>
    %3 = vector.broadcast %2 : i32 to vector<1x128xi32>
    %4 = arith.addi %1, %3 : vector<1x128xi32>
    %5 = vector.broadcast %0 : vector<24x1xi32> to vector<24x128xi32>
    %6 = vector.broadcast %4 : vector<1x128xi32> to vector<24x128xi32>
    %7 = arith.cmpi eq, %5, %6 : vector<24x128xi32>
    %8 = arith.extui %7 : vector<24x128xi1> to vector<24x128xi32>
    %c1 = arith.constant 1 : index
    %c0_2 = arith.constant 0 : index
    %9 = vector.load %arg3[%c1, %c0_2] : memref<4x128xi32, #tpu.memory_space<vmem>>, vector<1x128xi32>
    %c1_3 = arith.constant 1 : index
    %10 = memref.load %arg2[%c1_3] : memref<4xi32, #tpu.memory_space<smem>>
    %11 = vector.broadcast %10 : i32 to vector<1x128xi32>
    %12 = arith.addi %9, %11 : vector<1x128xi32>
    %13 = vector.broadcast %0 : vector<24x1xi32> to vector<24x128xi32>
    %14 = vector.broadcast %12 : vector<1x128xi32> to vector<24x128xi32>
    %15 = arith.cmpi eq, %13, %14 : vector<24x128xi32>
    %16 = arith.extui %15 : vector<24x128xi1> to vector<24x128xi32>
    %c2 = arith.constant 2 : index
    %c0_4 = arith.constant 0 : index
    %17 = vector.load %arg3[%c2, %c0_4] : memref<4x128xi32, #tpu.memory_space<vmem>>, vector<1x128xi32>
    %c2_5 = arith.constant 2 : index
    %18 = memref.load %arg2[%c2_5] : memref<4xi32, #tpu.memory_space<smem>>
    %19 = vector.broadcast %18 : i32 to vector<1x128xi32>
    %20 = arith.addi %17, %19 : vector<1x128xi32>
    %21 = vector.broadcast %0 : vector<24x1xi32> to vector<24x128xi32>
    %22 = vector.broadcast %20 : vector<1x128xi32> to vector<24x128xi32>
    %23 = arith.cmpi eq, %21, %22 : vector<24x128xi32>
    %24 = arith.extui %23 : vector<24x128xi1> to vector<24x128xi32>
    %c3 = arith.constant 3 : index
    %c0_6 = arith.constant 0 : index
    %25 = vector.load %arg3[%c3, %c0_6] : memref<4x128xi32, #tpu.memory_space<vmem>>, vector<1x128xi32>
    %c3_7 = arith.constant 3 : index
    %26 = memref.load %arg2[%c3_7] : memref<4xi32, #tpu.memory_space<smem>>
    %27 = vector.broadcast %26 : i32 to vector<1x128xi32>
    %28 = arith.addi %25, %27 : vector<1x128xi32>
    %29 = vector.broadcast %0 : vector<24x1xi32> to vector<24x128xi32>
    %30 = vector.broadcast %28 : vector<1x128xi32> to vector<24x128xi32>
    %31 = arith.cmpi eq, %29, %30 : vector<24x128xi32>
    %32 = arith.extui %31 : vector<24x128xi1> to vector<24x128xi32>
    %33 = arith.addi %8, %16 : vector<24x128xi32>
    %34 = arith.addi %24, %32 : vector<24x128xi32>
    %35 = arith.addi %33, %34 : vector<24x128xi32>
    %36 = arith.sitofp %35 : vector<24x128xi32> to vector<24x128xf32>
    %c0_8 = arith.constant 0 : index
    %c0_9 = arith.constant 0 : index
    %37 = vector.load %arg4[%c0_8, %c0_9] : memref<18x24xf32, #tpu.memory_space<vmem>>, vector<18x24xf32>
    %cst = arith.constant dense<0.000000e+00> : vector<18x128xf32>
    %38 = tpu.matmul %37, %36, %cst {dimension_numbers = #tpu.dot_dimension_numbers<[1], [0], [0], [1], [0, 0, 1, 1], [], []>} : vector<18x24xf32>, vector<24x128xf32>, vector<18x128xf32> -> vector<18x128xf32>
    %39 = vector.extract_strided_slice %38 {offsets = [0, 0], sizes = [16, 128], strides = [1, 1]} : vector<18x128xf32> to vector<16x128xf32>
    %40 = vector.extract_strided_slice %38 {offsets = [16, 0], sizes = [1, 128], strides = [1, 1]} : vector<18x128xf32> to vector<1x128xf32>
    %41 = vector.extract_strided_slice %38 {offsets = [17, 0], sizes = [1, 128], strides = [1, 1]} : vector<18x128xf32> to vector<1x128xf32>
    %42 = arith.mulf %39, %39 : vector<16x128xf32>
    %cst_10 = arith.constant dense<0.000000e+00> : vector<128xf32>
    %43 = vector.multi_reduction <add>, %42, %cst_10 [0] : vector<16x128xf32> to vector<128xf32>
    %44 = vector.shape_cast %43 : vector<128xf32> to vector<1x128xf32>
    %c0_11 = arith.constant 0 : index
    %45 = memref.load %arg1[%c0_11] : memref<1xf32, #tpu.memory_space<smem>>
    %46 = vector.broadcast %45 : f32 to vector<1x128xf32>
    %47 = arith.addf %40, %46 : vector<1x128xf32>
    %48 = arith.subf %44, %41 : vector<1x128xf32>
    %cst_12 = arith.constant 5.000000e-01 : f32
    %49 = vector.broadcast %cst_12 : f32 to vector<1x128xf32>
    %50 = arith.mulf %49, %48 : vector<1x128xf32>
    %51 = arith.addf %47, %50 : vector<1x128xf32>
    %52 = arith.negf %51 : vector<1x128xf32>
    %53 = math.exp %52 : vector<1x128xf32>
    %cst_13 = arith.constant 1.000000e+00 : f32
    %54 = vector.broadcast %cst_13 : f32 to vector<1x128xf32>
    %55 = arith.addf %54, %53 : vector<1x128xf32>
    %56 = arith.divf %54, %55 : vector<1x128xf32>
    %c0_14 = arith.constant 0 : index
    %c0_15 = arith.constant 0 : index
    %57 = vector.load %arg5[%c0_14, %c0_15] : memref<1x128xf32, #tpu.memory_space<vmem>>, vector<1x128xf32>
    tpu.vector_store %arg5[%c0_14, %c0_15], %56 {strides = array<i32>} : memref<1x128xf32, #tpu.memory_space<vmem>>, vector<1x128xf32>,
    return
  }
  func.func @transform_0(%arg0: i32) -> i32 {
    %c0_i32 = arith.constant 0 : i32
    %c0_i32_0 = arith.constant 0 : i32
    return %c0_i32 : i32
  }
  func.func @transform_1(%arg0: i32) -> i32 {
    %c0_i32 = arith.constant 0 : i32
    %c0_i32_0 = arith.constant 0 : i32
    return %c0_i32 : i32
  }
  func.func @transform_2(%arg0: i32) -> (i32, i32) {
    %c0_i32 = arith.constant 0 : i32
    %c0_i32_0 = arith.constant 0 : i32
    return %c0_i32, %arg0 : i32, i32
  }
  func.func @transform_3(%arg0: i32) -> (i32, i32) {
    %c0_i32 = arith.constant 0 : i32
    %c0_i32_0 = arith.constant 0 : i32
    %c0_i32_1 = arith.constant 0 : i32
    return %c0_i32, %c0_i32_0 : i32, i32
  }
  func.func @transform_4(%arg0: i32) -> (i32, i32) {
    %c0_i32 = arith.constant 0 : i32
    %c0_i32_0 = arith.constant 0 : i32
    return %c0_i32, %arg0 : i32, i32
  }
}

</mosaic_0001>

<llo_original>
// kernel: fm_model_forward.1
$region0: #{fm_model_forward.1}
  #allocation0 [shape = 'u32[]', space=smem, size = 0x4, offset = 0x4, fixed_abs, tag = 'smem constant byte address 0x4 - core index']
  #allocation1 [shape = 'u32[144,128]{1,0:T(1,128)}', space=vmem, size = 0x12000, scoped, tag = 'internal scratch']
  #allocation2 [shape = 'f32[1]{0:T(128)S(6)}', space=smem, size = 0x200, scoped, tag = 'scoped memory for fm_model_forward.1']
  %s0 = inlined_call_operand.<no memory space> [shape: f32[1], index: 0, kind: input, shape index: {}]
  %s1 = inlined_call_operand.vmem [shape: s32[4], index: 1, kind: input, shape index: {}]
  %s2 = inlined_call_operand.vmem [shape: s32[4,8], index: 2, kind: input, shape index: {}]
  %s3 = inlined_call_operand.vmem [shape: f32[18,24], index: 3, kind: input, shape index: {}]
  %s4 = inlined_call_operand.hbm [shape: f32[1,8], index: 4, kind: output, shape index: {}]
  %s5 = sld [smem:[#allocation0]]
  $region30: #{fm_model_forward.1} parent=0
    _
  %s7 = ssub.s32 1, %s5
  %s8 = scalar_select 0, %s7, %s5
  %9 = sst [smem:[#allocation2]] %s0
  $region1: #{fm_model_forward.1} parent=0
    #allocation3 [shape = 'u8[512]{0}', space=smem, size = 0x200, scoped, tag = 'input window, operand 1, single buffered']
    #allocation4 [shape = 's32[1]{0}', space=sflag, size = 0x4, scoped, tag = 'scoped memory for fm_model_forward.1']
    #allocation5 [shape = 's32[1]{0}', space=sflag, size = 0x4, scoped, tag = 'scoped memory for fm_model_forward.1']
    #allocation6 [shape = 'u8[512]{0}', space=vmem, size = 0x400, scoped, tag = 'output window, operand 0, single buffered']
    %10 = vsyncpa [#allocation5], 0
    %11 = vsyncpa [#allocation4], 0
    // Predicated region
    $region2: #{fm_model_forward.1} parent=1 // pred_check
      _
    $region3: #{fm_model_forward.1} parent=1 // pred_check_branch
      %13 = sbr.rel (0) target = $region5
    $region4: #{fm_model_forward.1} parent=1 // pred_region
      _
    $region5: #{fm_model_forward.1} parent=1 // pred_fallthru
      _
    // Predicated region
    $region6: #{fm_model_forward.1} parent=1 // pred_check
      _
    $region7: #{fm_model_forward.1} parent=1 // pred_check_branch
      %15 = sbr.rel (0) target = $region9
    $region8: #{fm_model_forward.1} parent=1 // pred_region
      %s17 = ssub.s32 16, 16
      %18 = vsyncadd [#allocation5], %s17
      %s20 = sshll.u32 %s1, 4
      %s21 = int_to_ptr.vmem [resolvable:$true] %s20
      %23 = dma.vmem_to_smem %s21, 16, [#allocation3], [#allocation5]
    $region9: #{fm_model_forward.1} parent=1 // pred_fallthru
      _
    // Predicated region
    $region10: #{fm_model_forward.1} parent=1 // pred_check
      _
    $region11: #{fm_model_forward.1} parent=1 // pred_check_branch
      %25 = sbr.rel (0) target = $region13
    $region12: #{fm_model_forward.1} parent=1 // pred_region
      _
    $region13: #{fm_model_forward.1} parent=1 // pred_fallthru
      _
    // Predicated region
    $region14: #{fm_model_forward.1} parent=1 // pred_check
      _
    $region15: #{fm_model_forward.1} parent=1 // pred_check_branch
      %27 = sbr.rel (0) target = $region17
    $region16: #{fm_model_forward.1} parent=1 // pred_region
      _
    $region17: #{fm_model_forward.1} parent=1 // pred_fallthru
      _
    // Predicated region
    $region18: #{fm_model_forward.1} parent=1 // pred_check
      _
    $region19: #{fm_model_forward.1} parent=1 // pred_check_branch
      %29 = sbr.rel (0) target = $region21
    $region20: #{fm_model_forward.1} parent=1 // pred_region
      %30 = dma.done [#allocation5], 16
    $region21: #{fm_model_forward.1} parent=1 // pred_fallthru
      _
    %31 = sfence
    %v32 = vlaneseq
    %v33 = vshrl.u32 %v32, 7
    %v34 = vadd.s32 %v33, 8
    %v35 = vadd.s32 %v33, 16
    %v36 = vld [vmem:[%s2] sm:$0x1]
    %s37 = sld [smem:[#allocation3]]
    %v38 = vstv %s37
    %v39 = vadd.s32 %v36, %v38
    %v40 = vlaneseq
    %v41 = vshrl.u32 %v40, 7
    %v42 = vsub.s32 0, %v41
    %v43 = vrot.slane %v39, %v42
    %vm44 = vcmp.eq.s32.totalorder %v33, %v43
    %vm45 = vcmp.eq.s32.totalorder %v34, %v43
    %vm46 = vcmp.eq.s32.totalorder %v35, %v43
    %v47 = vsel %vm44, 1, 0
    %v48 = vsel %vm45, 1, 0
    %v49 = vsel %vm46, 1, 0
    %v50 = vld [vmem:[%s2 + $0x1] sm:$0x1]
    %s51 = sld [smem:[#allocation3 + $0x1]]
    %v52 = vstv %s51
    %v53 = vadd.s32 %v50, %v52
    %v54 = vlaneseq
    %v55 = vshrl.u32 %v54, 7
    %v56 = vsub.s32 0, %v55
    %v57 = vrot.slane %v53, %v56
    %vm58 = vcmp.eq.s32.totalorder %v33, %v57
    %vm59 = vcmp.eq.s32.totalorder %v34, %v57
    %vm60 = vcmp.eq.s32.totalorder %v35, %v57
    %v61 = vsel %vm58, 1, 0
    %v62 = vsel %vm59, 1, 0
    %v63 = vsel %vm60, 1, 0
    %v64 = vld [vmem:[%s2 + $0x2] sm:$0x1]
    %s65 = sld [smem:[#allocation3 + $0x2]]
    %v66 = vstv %s65
    %v67 = vadd.s32 %v64, %v66
    %v68 = vlaneseq
    %v69 = vshrl.u32 %v68, 7
    %v70 = vsub.s32 0, %v69
    %v71 = vrot.slane %v67, %v70
    %vm72 = vcmp.eq.s32.totalorder %v33, %v71
    %vm73 = vcmp.eq.s32.totalorder %v34, %v71
    %vm74 = vcmp.eq.s32.totalorder %v35, %v71
    %v75 = vsel %vm72, 1, 0
    %v76 = vsel %vm73, 1, 0
    %v77 = vsel %vm74, 1, 0
    %v78 = vld [vmem:[%s2 + $0x3] sm:$0x1]
    %s79 = sld [smem:[#allocation3 + $0x3]]
    %v80 = vstv %s79
    %v81 = vadd.s32 %v78, %v80
    %v82 = vlaneseq
    %v83 = vshrl.u32 %v82, 7
    %v84 = vsub.s32 0, %v83
    %v85 = vrot.slane %v81, %v84
    %vm86 = vcmp.eq.s32.totalorder %v33, %v85
    %vm87 = vcmp.eq.s32.totalorder %v34, %v85
    %vm88 = vcmp.eq.s32.totalorder %v35, %v85
    %v89 = vsel %vm86, 1, 0
    %v90 = vsel %vm87, 1, 0
    %v91 = vsel %vm88, 1, 0
    %v92 = vadd.s32 %v47, %v61
    %v93 = vadd.s32 %v48, %v62
    %v94 = vadd.s32 %v49, %v63
    %v95 = vadd.s32 %v75, %v89
    %v96 = vadd.s32 %v76, %v90
    %v97 = vadd.s32 %v77, %v91
    %v98 = vadd.s32 %v92, %v95
    %v99 = vadd.s32 %v93, %v96
    %v100 = vadd.s32 %v94, %v97
    %v101 = vcvt.s32.f32 %v98
    %v102 = vcvt.s32.f32 %v99
    %v103 = vcvt.s32.f32 %v100
    %v104 = vld [vmem:[%s3] sm:$0xff]
    %v105 = vld [vmem:[%s3 + $0x8] sm:$0xff]
    %v106 = vld [vmem:[%s3 + $0x10] sm:$0x3]
    %vm107 = vcmask 195584
    %v109 = vsel %vm107, %v104, 0
    %v112 = vsel %vm107, %v105, 0
    %v115 = vsel %vm107, %v106, 0
    %117 = vmatprep.subr.mxu0 0.0
    %118 = vmatpush1.msra.mxu0 0.0
    %119 = vmatprep.subr.mxu0 0.0
    %120 = vmatpush1.msra.mxu0 0.0
    %121 = vmatprep.subr.mxu0 0.0
    %122 = vmatpush1.msra.mxu0 0.0
    %123 = vmatprep.subr.mxu0 0.0
    %124 = vmatpush1.msra.mxu0 0.0
    %125 = vmatprep.subr.mxu0 0.0
    %126 = vmatpush1.msra.mxu0 0.0
    %127 = vmatprep.subr.mxu0 0.0
    %128 = vmatpush1.msra.mxu0 0.0
    %129 = vmatprep.subr.mxu0 0.0
    %130 = vmatpush1.msra.mxu0 0.0
    %131 = vmatprep.subr.mxu0 0.0
    %132 = vmatpush1.msra.mxu0 0.0
    %133 = vmatprep.subr.mxu0 0.0
    %134 = vmatpush1.msra.mxu0 0.0
    %135 = vmatprep.subr.mxu0 0.0
    %136 = vmatpush1.msra.mxu0 0.0
    %137 = vmatprep.subr.mxu0 0.0
    %138 = vmatpush1.msra.mxu0 0.0
    %139 = vmatprep.subr.mxu0 0.0
    %140 = vmatpush1.msra.mxu0 0.0
    %141 = vmatprep.subr.mxu0 0.0
    %142 = vmatpush1.msra.mxu0 0.0
    %143 = vmatprep.subr.mxu0 0.0
    %144 = vmatpush1.msra.mxu0 %v103
    %145 = vmatprep.subr.mxu0 0.0
    %146 = vmatpush1.msra.mxu0 %v102
    %147 = vmatprep.subr.mxu0 0.0
    %148 = vmatpush1.msra.mxu0 %v101
    %149 = vmatprep.subr.mxu0 0.0
    %150 = vmatpush2.msra.mxu0 0.0
    %151 = vmatprep.subr.mxu0 0.0
    %152 = vmatpush2.msra.mxu0 0.0
    %153 = vmatprep.subr.mxu0 0.0
    %154 = vmatpush2.msra.mxu0 0.0
    %155 = vmatprep.subr.mxu0 0.0
    %156 = vmatpush2.msra.mxu0 0.0
    %157 = vmatprep.subr.mxu0 0.0
    %158 = vmatpush2.msra.mxu0 0.0
    %159 = vmatprep.subr.mxu0 0.0
    %160 = vmatpush2.msra.mxu0 0.0
    %161 = vmatprep.subr.mxu0 0.0
    %162 = vmatpush2.msra.mxu0 0.0
    %163 = vmatprep.subr.mxu0 0.0
    %164 = vmatpush2.msra.mxu0 0.0
    %165 = vmatprep.subr.mxu0 0.0
    %166 = vmatpush2.msra.mxu0 0.0
    %167 = vmatprep.subr.mxu0 0.0
    %168 = vmatpush2.msra.mxu0 0.0
    %169 = vmatprep.subr.mxu0 0.0
    %170 = vmatpush2.msra.mxu0 0.0
    %171 = vmatprep.subr.mxu0 0.0
    %172 = vmatpush2.msra.mxu0 0.0
    %173 = vmatprep.subr.mxu0 0.0
    %174 = vmatpush2.msra.mxu0 0.0
    %175 = vmatprep.subr.mxu0 0.0
    %176 = vmatpush2.msra.mxu0 0.0
    %177 = vmatprep.subr.mxu0 0.0
    %178 = vmatpush2.msra.mxu0 0.0
    %179 = vmatprep.subr.mxu0 0.0
    %180 = vmatpush2.msra.mxu0 0.0
    %181 = vmatprep.mubr.f32.mxu0 0.0
    %182 = vmatmul.mubr.f32.gmra.mxu0 %v109
    %v183 = vpop.f32.mrf.mxu0
    %v184 = vadd.f32 0.0, %v183
    %v185 = vpop.f32.mrf.mxu0
    %186 = vmatprep.mubr.f32.mxu0 0.0
    %187 = vmatmul.mubr.f32.gmra.mxu0 %v112
    %v188 = vpop.f32.mrf.mxu0
    %v189 = vadd.f32 0.0, %v188
    %v190 = vpop.f32.mrf.mxu0
    %191 = vmatprep.mubr.f32.mxu0 0.0
    %192 = vmatmul.mubr.f32.gmra.mxu0 %v115
    %v193 = vpop.f32.mrf.mxu0
    %v194 = vadd.f32 0.0, %v193
    %v195 = vpop.f32.mrf.mxu0
    %196 = vdwg.mxu0
    %v197 = vmul.f32 %v184, %v184
    %v198 = vmul.f32 %v189, %v189
    %v199 = vadd.f32 %v197, %v198
    %v200 = vrot.slane %v199, 4
    %v201 = vadd.f32 %v199, %v200
    %v202 = vrot.slane %v201, 2
    %v203 = vadd.f32 %v201, %v202
    %v204 = vrot.slane %v203, 1
    %v205 = vadd.f32 %v203, %v204
    %s206 = sld [smem:[#allocation2]]
    %v207 = vstv %s206
    %v208 = vadd.f32 %v194, %v207
    %v209 = vsub.f32 %v205, %v194
    %v210 = vmul.f32 %v209, 0.5
    %v212 = vrot.slane %v210, 1
    %v214 = vadd.f32 %v208, %v212
    %v215 = vxor.u32 %v214, 2147483648
    %v216 = vmul.f32 %v215, 1.442695
    %v217 = vpow.pop %v216
    %v218 = vadd.f32 %v217, 1.0
    %v219 = vrcp.pop %v218
    %v220 = vmul.f32 1.0, %v219
    %221 = vst [vmem:[#allocation6] sm:$0x1] %v220
    // Predicated region
    $region22: #{fm_model_forward.1} parent=1 // pred_check
      _
    $region23: #{fm_model_forward.1} parent=1 // pred_check_branch
      %223 = sbr.rel (0) target = $region25
    $region24: #{fm_model_forward.1} parent=1 // pred_region
      %s225 = ssub.s32 16, 16
      %226 = vsyncadd [#allocation4], %s225
      %s228 = sshll.u32 [#allocation6], 4
      %s229 = int_to_ptr.vmem [resolvable:$true] %s228
      %231 = dma.vmem_to_hbm [thread:$0]  %s229, 16, %s4, [#allocation4]
    $region25: #{fm_model_forward.1} parent=1 // pred_fallthru
      _
    // Predicated region
    $region26: #{fm_model_forward.1} parent=1 // pred_check
      _
    $region27: #{fm_model_forward.1} parent=1 // pred_check_branch
      %233 = sbr.rel (0) target = $region29
    $region28: #{fm_model_forward.1} parent=1 // pred_region
      %234 = dma.done [#allocation4], 16
    $region29: #{fm_model_forward.1} parent=1 // pred_fallthru
      _
    %235 = vsyncpa [#allocation4], 1
    %236 = vsyncpa [#allocation5], 1

</llo_original>
